<compile_context>
chip_gen: v6e
topology: v6e:2x2x1
jax: 0.10.0
libtpu: 0.0.40
codegen_flags: <defaults>
</compile_context>

<pallas_src>
import functools

import jax
import jax.numpy as jnp
from jax.experimental import pallas as pl
from jax.experimental.pallas import tpu as pltpu


def _round_up(x, m):
    return (x + m - 1) // m * m


def _mlp_kernel(dims, x_ref, w_ref, b_ref, o_ref):
    """Fused MLP over one batch tile.

    dims : static tuple of (in_i, out_i) per layer.
    x_ref: (tile_b, in_0) f32
    w_ref: (L, K_pad, N_pad) bf16, zero-padded, already (in, out) transposed
    b_ref: (L, 1, N_pad) f32, zero-padded
    o_ref: (tile_b, 1) f32
    """
    n_layers = len(dims)
    h = x_ref[...].astype(jnp.float32)
    for i, (k, n) in enumerate(dims):
        w = w_ref[i, :k, :n]            # static slice of the resident slab
        b = b_ref[i, :, :n]             # (1, n) f32
        # bf16 MXU inputs, f32 accumulation.
        h = jnp.dot(h.astype(jnp.bfloat16), w,
                    preferred_element_type=jnp.float32) + b
        if i < n_layers - 1:
            h = jnp.maximum(h, 0.0)     # ReLU (f32 — safe on v5e VPU)
        else:
            h = jax.nn.sigmoid(h)       # final Sigmoid (f32 EUP)
    o_ref[...] = h.astype(o_ref.dtype)


def prepare_params(weights, biases, compute_dtype=jnp.bfloat16):
    """One-time parameter prep (call once, reuse every forward).

    weights[i]: (out_i, in_i) like nn.Linear; biases[i]: (out_i,).
    Returns (w_slab, b_slab, dims) with weights transposed to (in, out),
    cast to `compute_dtype` and packed into one zero-padded slab.
    """
    n_layers = len(weights)
    dims = tuple((int(w.shape[1]), int(w.shape[0])) for w in weights)
    k_pad = _round_up(max(k for k, _ in dims), 16)    # bf16 sublane packing
    n_pad = _round_up(max(n for _, n in dims), 128)   # lane width
    w_slab = jnp.zeros((n_layers, k_pad, n_pad), compute_dtype)
    b_slab = jnp.zeros((n_layers, 1, n_pad), jnp.float32)
    for i, (w, b) in enumerate(zip(weights, biases)):
        wt = jnp.asarray(w, jnp.float32).T.astype(compute_dtype)  # (in, out)
        w_slab = w_slab.at[i, : wt.shape[0], : wt.shape[1]].set(wt)
        b_slab = b_slab.at[i, 0, : b.shape[0]].set(jnp.asarray(b, jnp.float32))
    return w_slab, b_slab, dims


def binary_classifier_forward(x, w_slab, b_slab, dims, tile_b=2048):
    """x: (batch, dims[0][0]) f32 -> (batch, 1) f32 sigmoid probabilities."""
    batch, in_dim = x.shape
    assert in_dim == dims[0][0], (in_dim, dims)

    # Largest batch tile that makes sense; pad batch to a multiple of it.
    tile_b = int(min(tile_b, _round_up(batch, 8)))
    padded_batch = _round_up(batch, tile_b)
    if padded_batch != batch:
        x = jnp.pad(x, ((0, padded_batch - batch), (0, 0)))
    grid = (padded_batch // tile_b,)

    kernel = functools.partial(_mlp_kernel, dims)
    out = pl.pallas_call(
        kernel,
        out_shape=jax.ShapeDtypeStruct((padded_batch, 1), jnp.float32),
        grid_spec=pltpu.PrefetchScalarGridSpec(
            num_scalar_prefetch=0,
            grid=grid,
            in_specs=[
                pl.BlockSpec((tile_b, in_dim), lambda i: (i, 0)),
                # Constant block index -> slabs DMA'd once, stay VMEM-resident.
                pl.BlockSpec(w_slab.shape, lambda i: (0, 0, 0)),
                pl.BlockSpec(b_slab.shape, lambda i: (0, 0, 0)),
            ],
            out_specs=pl.BlockSpec((tile_b, 1), lambda i: (i, 0)),
        ),
        compiler_params=pltpu.CompilerParams(
            dimension_semantics=("parallel",)),   # both TCs on v7x
    )(x, w_slab, b_slab)
    return out[:batch]


def init_params(layer_sizes, key):
    """Deterministic init mimicking nn.Linear's U(-1/sqrt(in), 1/sqrt(in))."""
    sizes = list(layer_sizes) + [1]
    weights, biases = [], []
    for ch_in, ch_out in zip(sizes[:-1], sizes[1:]):
        key, kw, kb = jax.random.split(key, 3)
        bound = 1.0 / jnp.sqrt(jnp.float32(ch_in))
        w = jax.random.uniform(kw, (ch_out, ch_in), jnp.float32, -bound, bound)
        b = jax.random.uniform(kb, (ch_out,), jnp.float32, -bound, bound)
        weights.append(w)
        biases.append(b)
    return weights, biases


def reference_forward(x, weights, biases, bf16_dots=False):
    """Pure-JAX reference. bf16_dots=True mirrors the kernel's dot precision."""
    h = x
    n = len(weights)
    for i, (w, b) in enumerate(zip(weights, biases)):
        wt = w.T
        if bf16_dots:
            h = jnp.dot(h.astype(jnp.bfloat16), wt.astype(jnp.bfloat16),
                        preferred_element_type=jnp.float32) + b
        else:
            h = h @ wt + b
        if i < n - 1:
            h = jnp.maximum(h, 0.0)
        else:
            h = jax.nn.sigmoid(h)
    return h


if __name__ == "__main__":
    layer_sizes = [32, 64, 16]   # module appends the final output size of 1
    batch = 8

    key = jax.random.PRNGKey(0)
    key, kx = jax.random.split(key)
    x = jax.random.normal(kx, (batch, layer_sizes[0]), jnp.float32)

    weights, biases = init_params(layer_sizes, key)

    # One-time parameter prep (hoisted out of the forward pass).
    w_slab, b_slab, dims = prepare_params(weights, biases)

    out = binary_classifier_forward(x, w_slab, b_slab, dims)
    out = jax.block_until_ready(out)

    ref_bf16 = reference_forward(x, weights, biases, bf16_dots=True)
    ref_f32 = reference_forward(x, weights, biases, bf16_dots=False)

    assert out.shape == (batch, 1), out.shape
    # Tight check against a reference with matching (bf16-in, f32-acc) dots.
    assert jnp.allclose(out, ref_bf16, atol=1e-3, rtol=1e-3), (out, ref_bf16)
    # Looser check against the full-f32 reference (bf16 quantization slack).
    assert jnp.allclose(out, ref_f32, atol=3e-2, rtol=3e-2), (out, ref_f32)

    print("KERNEL_OK")
</pallas_src>

<mosaic_0001>
module attributes {stable_mosaic.version = 11 : i64} {
  func.func @_mlp_kernel(%arg0: i32, %arg1: memref<8x32xf32, #tpu.memory_space<vmem>>, %arg2: memref<3x64x128xbf16, #tpu.memory_space<vmem>>, %arg3: memref<3x1x128xf32, #tpu.memory_space<vmem>>, %arg4: memref<8x1xf32, #tpu.memory_space<vmem>>) attributes {dimension_semantics = [#tpu.dimension_semantics<parallel>], iteration_bounds = array<i64: 1>, scalar_prefetch = 0 : i64, scratch_operands = 0 : i64, tpu.core_type = #tpu.core_type<tc>, window_params = [{transform_indices = @transform_0, window_bounds = array<i64: 8, 32>}, {pipeline_mode = #tpu.pipeline_mode<synchronous>, transform_indices = @transform_1, window_bounds = array<i64: 3, 64, 128>}, {pipeline_mode = #tpu.pipeline_mode<synchronous>, transform_indices = @transform_2, window_bounds = array<i64: 3, 1, 128>}, {transform_indices = @transform_3, window_bounds = array<i64: 8, 1>}]} {
    %c0 = arith.constant 0 : index
    %c0_0 = arith.constant 0 : index
    %0 = vector.load %arg1[%c0, %c0_0] : memref<8x32xf32, #tpu.memory_space<vmem>>, vector<8x32xf32>
    %c0_1 = arith.constant 0 : index
    %c0_2 = arith.constant 0 : index
    %c0_3 = arith.constant 0 : index
    %1 = vector.load %arg2[%c0_1, %c0_2, %c0_3] : memref<3x64x128xbf16, #tpu.memory_space<vmem>>, vector<1x32x64xbf16>
    %2 = vector.shape_cast %1 : vector<1x32x64xbf16> to vector<32x64xbf16>
    %c0_4 = arith.constant 0 : index
    %c0_5 = arith.constant 0 : index
    %c0_6 = arith.constant 0 : index
    %3 = vector.load %arg3[%c0_4, %c0_5, %c0_6] : memref<3x1x128xf32, #tpu.memory_space<vmem>>, vector<1x1x64xf32>
    %4 = vector.shape_cast %3 : vector<1x1x64xf32> to vector<1x64xf32>
    %5 = arith.truncf %0 : vector<8x32xf32> to vector<8x32xbf16>
    %cst = arith.constant dense<0.000000e+00> : vector<8x64xf32>
    %6 = tpu.matmul %5, %2, %cst {dimension_numbers = #tpu.dot_dimension_numbers<[1], [0], [0], [1], [0, 0, 1, 1], [], []>} : vector<8x32xbf16>, vector<32x64xbf16>, vector<8x64xf32> -> vector<8x64xf32>
    %7 = vector.broadcast %4 : vector<1x64xf32> to vector<8x64xf32>
    %8 = arith.addf %6, %7 : vector<8x64xf32>
    %cst_7 = arith.constant 0.000000e+00 : f32
    %9 = vector.broadcast %cst_7 : f32 to vector<8x64xf32>
    %10 = arith.maximumf %8, %9 : vector<8x64xf32>
    %c1 = arith.constant 1 : index
    %c0_8 = arith.constant 0 : index
    %c0_9 = arith.constant 0 : index
    %11 = vector.load %arg2[%c1, %c0_8, %c0_9] : memref<3x64x128xbf16, #tpu.memory_space<vmem>>, vector<1x64x16xbf16>
    %12 = vector.shape_cast %11 : vector<1x64x16xbf16> to vector<64x16xbf16>
    %c1_10 = arith.constant 1 : index
    %c0_11 = arith.constant 0 : index
    %c0_12 = arith.constant 0 : index
    %13 = vector.load %arg3[%c1_10, %c0_11, %c0_12] : memref<3x1x128xf32, #tpu.memory_space<vmem>>, vector<1x1x16xf32>
    %14 = vector.shape_cast %13 : vector<1x1x16xf32> to vector<1x16xf32>
    %15 = arith.truncf %10 : vector<8x64xf32> to vector<8x64xbf16>
    %cst_13 = arith.constant dense<0.000000e+00> : vector<8x16xf32>
    %16 = tpu.matmul %15, %12, %cst_13 {dimension_numbers = #tpu.dot_dimension_numbers<[1], [0], [0], [1], [0, 0, 1, 1], [], []>} : vector<8x64xbf16>, vector<64x16xbf16>, vector<8x16xf32> -> vector<8x16xf32>
    %17 = vector.broadcast %14 : vector<1x16xf32> to vector<8x16xf32>
    %18 = arith.addf %16, %17 : vector<8x16xf32>
    %cst_14 = arith.constant 0.000000e+00 : f32
    %19 = vector.broadcast %cst_14 : f32 to vector<8x16xf32>
    %20 = arith.maximumf %18, %19 : vector<8x16xf32>
    %c2 = arith.constant 2 : index
    %c0_15 = arith.constant 0 : index
    %c0_16 = arith.constant 0 : index
    %21 = vector.load %arg2[%c2, %c0_15, %c0_16] : memref<3x64x128xbf16, #tpu.memory_space<vmem>>, vector<1x16x1xbf16>
    %22 = vector.shape_cast %21 : vector<1x16x1xbf16> to vector<16x1xbf16>
    %c2_17 = arith.constant 2 : index
    %c0_18 = arith.constant 0 : index
    %c0_19 = arith.constant 0 : index
    %23 = vector.load %arg3[%c2_17, %c0_18, %c0_19] : memref<3x1x128xf32, #tpu.memory_space<vmem>>, vector<1x1x1xf32>
    %24 = vector.shape_cast %23 : vector<1x1x1xf32> to vector<1x1xf32>
    %25 = arith.truncf %20 : vector<8x16xf32> to vector<8x16xbf16>
    %cst_20 = arith.constant dense<0.000000e+00> : vector<8x1xf32>
    %26 = tpu.matmul %25, %22, %cst_20 {dimension_numbers = #tpu.dot_dimension_numbers<[1], [0], [0], [1], [0, 0, 1, 1], [], []>} : vector<8x16xbf16>, vector<16x1xbf16>, vector<8x1xf32> -> vector<8x1xf32>
    %27 = vector.broadcast %24 : vector<1x1xf32> to vector<8x1xf32>
    %28 = arith.addf %26, %27 : vector<8x1xf32>
    %29 = arith.negf %28 : vector<8x1xf32>
    %30 = math.exp %29 : vector<8x1xf32>
    %cst_21 = arith.constant 1.000000e+00 : f32
    %31 = vector.broadcast %cst_21 : f32 to vector<8x1xf32>
    %32 = arith.addf %31, %30 : vector<8x1xf32>
    %33 = arith.divf %31, %32 : vector<8x1xf32>
    %c0_22 = arith.constant 0 : index
    %c0_23 = arith.constant 0 : index
    %34 = vector.load %arg4[%c0_22, %c0_23] : memref<8x1xf32, #tpu.memory_space<vmem>>, vector<8x1xf32>
    tpu.vector_store %arg4[%c0_22, %c0_23], %33 {strides = array<i32>} : memref<8x1xf32, #tpu.memory_space<vmem>>, vector<8x1xf32>,
    return
  }
  func.func @transform_0(%arg0: i32) -> (i32, i32) {
    %c0_i32 = arith.constant 0 : i32
    %c0_i32_0 = arith.constant 0 : i32
    return %arg0, %c0_i32 : i32, i32
  }
  func.func @transform_1(%arg0: i32) -> (i32, i32, i32) {
    %c0_i32 = arith.constant 0 : i32
    %c0_i32_0 = arith.constant 0 : i32
    %c0_i32_1 = arith.constant 0 : i32
    %c0_i32_2 = arith.constant 0 : i32
    return %c0_i32, %c0_i32_0, %c0_i32_1 : i32, i32, i32
  }
  func.func @transform_2(%arg0: i32) -> (i32, i32, i32) {
    %c0_i32 = arith.constant 0 : i32
    %c0_i32_0 = arith.constant 0 : i32
    %c0_i32_1 = arith.constant 0 : i32
    %c0_i32_2 = arith.constant 0 : i32
    return %c0_i32, %c0_i32_0, %c0_i32_1 : i32, i32, i32
  }
  func.func @transform_3(%arg0: i32) -> (i32, i32) {
    %c0_i32 = arith.constant 0 : i32
    %c0_i32_0 = arith.constant 0 : i32
    return %arg0, %c0_i32 : i32, i32
  }
}

</mosaic_0001>

<llo_original>
// kernel: tpu_custom_call.1
$region0: #{tpu_custom_call.1}
  #allocation0 [shape = 'u32[]', space=smem, size = 0x4, offset = 0x4, fixed_abs, tag = 'smem constant byte address 0x4 - core index']
  #allocation1 [shape = 'u32[144,128]{1,0:T(1,128)}', space=vmem, size = 0x12000, scoped, tag = 'internal scratch']
  %s0 = inlined_call_operand.hbm [shape: f32[8,32], index: 0, kind: input, shape index: {}]
  %s1 = inlined_call_operand.hbm [shape: bf16[3,64,128], index: 1, kind: input, shape index: {}]
  %s2 = inlined_call_operand.vmem [shape: f32[3,1,128], index: 2, kind: input, shape index: {}]
  %s3 = inlined_call_operand.vmem [shape: f32[8,1], index: 3, kind: output, shape index: {}]
  %s4 = sld [smem:[#allocation0]]
  $region30: #{tpu_custom_call.1} parent=0
    _
  %s6 = ssub.s32 1, %s4
  %s7 = scalar_select 0, %s6, %s4
  $region1: #{tpu_custom_call.1} parent=0
    #allocation2 [shape = 'u8[4096]{0}', space=vmem, size = 0x1000, scoped, tag = 'input window, operand 0, single buffered']
    #allocation3 [shape = 's32[1]{0}', space=sflag, size = 0x4, scoped, tag = 'scoped memory for tpu_custom_call.1']
    #allocation4 [shape = 'u8[49152]{0}', space=vmem, size = 0xc000, scoped, tag = 'input window, operand 1, single buffered']
    #allocation5 [shape = 's32[1]{0}', space=sflag, size = 0x4, scoped, tag = 'scoped memory for tpu_custom_call.1']
    %8 = vsyncpa [#allocation3], 0
    %9 = vsyncpa [#allocation5], 0
    // Predicated region
    $region2: #{tpu_custom_call.1} parent=1 // pred_check
      _
    $region3: #{tpu_custom_call.1} parent=1 // pred_check_branch
      %11 = sbr.rel (0) target = $region5
    $region4: #{tpu_custom_call.1} parent=1 // pred_region
      %s13 = ssub.s32 128, 128
      %14 = vsyncadd [#allocation3], %s13
      %s16 = sshll.u32 [#allocation2], 4
      %s17 = int_to_ptr.vmem [resolvable:$true] %s16
      %19 = dma.hbm_to_vmem [thread:$0]  %s0, 128, %s17, [#allocation3]
    $region5: #{tpu_custom_call.1} parent=1 // pred_fallthru
      _
    // Predicated region
    $region6: #{tpu_custom_call.1} parent=1 // pred_check
      _
    $region7: #{tpu_custom_call.1} parent=1 // pred_check_branch
      %21 = sbr.rel (0) target = $region9
    $region8: #{tpu_custom_call.1} parent=1 // pred_region
      %s23 = ssub.s32 1536, 1536
      %24 = vsyncadd [#allocation5], %s23
      %s25 = sshll.u32 [#allocation4], 4
      %s26 = int_to_ptr.vmem [resolvable:$true] %s25
      %31 = dma.hbm_to_vmem [thread:$0]  %s1, 1536, %s26, [#allocation5], 64, 64, 4
    $region9: #{tpu_custom_call.1} parent=1 // pred_fallthru
      _
    // Predicated region
    $region10: #{tpu_custom_call.1} parent=1 // pred_check
      _
    $region11: #{tpu_custom_call.1} parent=1 // pred_check_branch
      %33 = sbr.rel (0) target = $region13
    $region12: #{tpu_custom_call.1} parent=1 // pred_region
      _
    $region13: #{tpu_custom_call.1} parent=1 // pred_fallthru
      _
    // Predicated region
    $region14: #{tpu_custom_call.1} parent=1 // pred_check
      _
    $region15: #{tpu_custom_call.1} parent=1 // pred_check_branch
      %35 = sbr.rel (0) target = $region17
    $region16: #{tpu_custom_call.1} parent=1 // pred_region
      %36 = dma.done [#allocation3], 128
    $region17: #{tpu_custom_call.1} parent=1 // pred_fallthru
      _
    // Predicated region
    $region18: #{tpu_custom_call.1} parent=1 // pred_check
      _
    $region19: #{tpu_custom_call.1} parent=1 // pred_check_branch
      %38 = sbr.rel (0) target = $region21
    $region20: #{tpu_custom_call.1} parent=1 // pred_region
      %39 = dma.done [#allocation5], 1536
    $region21: #{tpu_custom_call.1} parent=1 // pred_fallthru
      _
    %v41 = vld [vmem:[#allocation2] sm:$0xff]
    %v42 = vld [vmem:[#allocation4] sm:$0xf]
    %v43 = vld [vmem:[#allocation4 + $0x4] sm:$0xf]
    %v44 = vld [vmem:[#allocation4 + $0x8] sm:$0xf]
    %v45 = vld [vmem:[#allocation4 + $0xc] sm:$0xf]
    %v46 = vld [vmem:[%s2] sm:$0x1]
    %v47 = vpack.c.bf16 %v41, %v41
    %v49 = vlaneseq
    %v50 = vshrl.u32 %v49, 7
    %v51 = vsub.s32 0, %v50
    %v52 = vrot.slane %v46, %v51
    %v58 = vunpack.c.l.b16 %v42
    %v59 = vunpack.c.l.b16 %v43
    %v60 = vunpack.c.l.b16 %v44
    %v61 = vunpack.c.l.b16 %v45
    %v62 = vpack.c.b16 %v59, %v58
    %v63 = vpack.c.b16 %v61, %v60
    %vm66 = vcmask 261120
    %v68 = vsel %vm66, %v47, 0
    %70 = vmatprep.subr.bf16.mxu0 0
    %71 = vmatpush1.bf16.msra.mxu0 0
    %72 = vmatprep.subr.bf16.mxu0 0
    %73 = vmatpush1.bf16.msra.mxu0 0
    %74 = vmatprep.subr.bf16.mxu0 0
    %75 = vmatpush1.bf16.msra.mxu0 0
    %76 = vmatprep.subr.bf16.mxu0 0
    %77 = vmatpush1.bf16.msra.mxu0 0
    %78 = vmatprep.subr.bf16.mxu0 0
    %79 = vmatpush1.bf16.msra.mxu0 0
    %80 = vmatprep.subr.bf16.mxu0 0
    %81 = vmatpush1.bf16.msra.mxu0 0
    %82 = vmatprep.subr.bf16.mxu0 0
    %83 = vmatpush1.bf16.msra.mxu0 %v63
    %84 = vmatprep.subr.bf16.mxu0 0
    %85 = vmatpush1.bf16.msra.mxu0 %v62
    %86 = vmatprep.subr.bf16.mxu0 0
    %87 = vmatpush2.bf16.msra.mxu0 0
    %88 = vmatprep.subr.bf16.mxu0 0
    %89 = vmatpush2.bf16.msra.mxu0 0
    %90 = vmatprep.subr.bf16.mxu0 0
    %91 = vmatpush2.bf16.msra.mxu0 0
    %92 = vmatprep.subr.bf16.mxu0 0
    %93 = vmatpush2.bf16.msra.mxu0 0
    %94 = vmatprep.subr.bf16.mxu0 0
    %95 = vmatpush2.bf16.msra.mxu0 0
    %96 = vmatprep.subr.bf16.mxu0 0
    %97 = vmatpush2.bf16.msra.mxu0 0
    %98 = vmatprep.subr.bf16.mxu0 0
    %99 = vmatpush2.bf16.msra.mxu0 0
    %100 = vmatprep.subr.bf16.mxu0 0
    %101 = vmatpush2.bf16.msra.mxu0 0
    %102 = vmatprep.mubr.bf16.mxu0 0
    %103 = vmatmul.mubr.bf16.gmra.mxu0 %v68
    %v104 = vpop.f32.mrf.mxu0
    %v105 = vadd.f32 %v52, %v104
    %v106 = vpop.f32.mrf.mxu0
    %v107 = vpop.f32.mrf.mxu0
    %v108 = vpop.f32.mrf.mxu0
    %109 = vdwg.mxu0
    %v110 = vmax.f32 %v105, 0.0
    %s111 = scalar_lea.vmem [#allocation4], 32
    %v112 = vld [vmem:[%s111] sm:$0xf]
    %v113 = vld [vmem:[%s111 + $0x4] sm:$0xf]
    %v114 = vld [vmem:[%s111 + $0x8] sm:$0xf]
    %v115 = vld [vmem:[%s111 + $0xc] sm:$0xf]
    %v116 = vld [vmem:[%s111 + $0x10] sm:$0xf]
    %v117 = vld [vmem:[%s111 + $0x14] sm:$0xf]
    %v118 = vld [vmem:[%s111 + $0x18] sm:$0xf]
    %v119 = vld [vmem:[%s111 + $0x1c] sm:$0xf]
    %s120 = scalar_lea.vmem %s2, 1
    %v121 = vld [vmem:[%s120] sm:$0x1]
    %v122 = vpack.c.bf16 %v110, %v110
    %v124 = vlaneseq
    %v125 = vshrl.u32 %v124, 7
    %v126 = vsub.s32 0, %v125
    %v127 = vrot.slane %v121, %v126
    %v137 = vunpack.c.l.b16 %v112
    %v138 = vunpack.c.l.b16 %v113
    %v139 = vunpack.c.l.b16 %v114
    %v140 = vunpack.c.l.b16 %v115
    %v141 = vunpack.c.l.b16 %v116
    %v142 = vunpack.c.l.b16 %v117
    %v143 = vunpack.c.l.b16 %v118
    %v144 = vunpack.c.l.b16 %v119
    %v145 = vpack.c.b16 %v138, %v137
    %v146 = vpack.c.b16 %v140, %v139
    %v147 = vpack.c.b16 %v142, %v141
    %v148 = vpack.c.b16 %v144, %v143
    %vm153 = vcmask 523264
    %v155 = vsel %vm153, %v122, 0
    %157 = vmatprep.subr.bf16.mxu0 0
    %158 = vmatpush1.bf16.msra.mxu0 0
    %159 = vmatprep.subr.bf16.mxu0 0
    %160 = vmatpush1.bf16.msra.mxu0 0
    %161 = vmatprep.subr.bf16.mxu0 0
    %162 = vmatpush1.bf16.msra.mxu0 0
    %163 = vmatprep.subr.bf16.mxu0 0
    %164 = vmatpush1.bf16.msra.mxu0 0
    %165 = vmatprep.subr.bf16.mxu0 0
    %166 = vmatpush1.bf16.msra.mxu0 %v148
    %167 = vmatprep.subr.bf16.mxu0 0
    %168 = vmatpush1.bf16.msra.mxu0 %v147
    %169 = vmatprep.subr.bf16.mxu0 0
    %170 = vmatpush1.bf16.msra.mxu0 %v146
    %171 = vmatprep.subr.bf16.mxu0 0
    %172 = vmatpush1.bf16.msra.mxu0 %v145
    %173 = vmatprep.subr.bf16.mxu0 0
    %174 = vmatpush2.bf16.msra.mxu0 0
    %175 = vmatprep.subr.bf16.mxu0 0
    %176 = vmatpush2.bf16.msra.mxu0 0
    %177 = vmatprep.subr.bf16.mxu0 0
    %178 = vmatpush2.bf16.msra.mxu0 0
    %179 = vmatprep.subr.bf16.mxu0 0
    %180 = vmatpush2.bf16.msra.mxu0 0
    %181 = vmatprep.subr.bf16.mxu0 0
    %182 = vmatpush2.bf16.msra.mxu0 0
    %183 = vmatprep.subr.bf16.mxu0 0
    %184 = vmatpush2.bf16.msra.mxu0 0
    %185 = vmatprep.subr.bf16.mxu0 0
    %186 = vmatpush2.bf16.msra.mxu0 0
    %187 = vmatprep.subr.bf16.mxu0 0
    %188 = vmatpush2.bf16.msra.mxu0 0
    %189 = vmatprep.mubr.bf16.mxu0 0
    %190 = vmatmul.mubr.bf16.gmra.mxu0 %v155
    %v191 = vpop.f32.mrf.mxu0
    %v192 = vadd.f32 %v127, %v191
    %v193 = vpop.f32.mrf.mxu0
    %v194 = vpop.f32.mrf.mxu0
    %v195 = vpop.f32.mrf.mxu0
    %196 = vdwg.mxu0
    %v197 = vmax.f32 %v192, 0.0
    %s198 = scalar_lea.vmem [#allocation4], 64
    %v199 = vld [vmem:[%s198] sm:$0xf]
    %v200 = vld [vmem:[%s198 + $0x4] sm:$0xf]
    %s201 = scalar_lea.vmem %s2, 2
    %v202 = vld [vmem:[%s201] sm:$0x1]
    %v203 = vpack.c.bf16 %v197, %v197
    %v205 = vlaneseq
    %v206 = vshrl.u32 %v205, 7
    %v207 = vsub.s32 0, %v206
    %v208 = vrot.slane %v202, %v207
    %v212 = vunpack.c.l.b16 %v199
    %v213 = vunpack.c.l.b16 %v200
    %v214 = vpack.c.b16 %v213, %v212
    %vm216 = vcmask 130048
    %v218 = vsel %vm216, %v203, 0
    %220 = vmatprep.subr.bf16.mxu0 0
    %221 = vmatpush1.bf16.msra.mxu0 0
    %222 = vmatprep.subr.bf16.mxu0 0
    %223 = vmatpush1.bf16.msra.mxu0 0
    %224 = vmatprep.subr.bf16.mxu0 0
    %225 = vmatpush1.bf16.msra.mxu0 0
    %226 = vmatprep.subr.bf16.mxu0 0
    %227 = vmatpush1.bf16.msra.mxu0 0
    %228 = vmatprep.subr.bf16.mxu0 0
    %229 = vmatpush1.bf16.msra.mxu0 0
    %230 = vmatprep.subr.bf16.mxu0 0
    %231 = vmatpush1.bf16.msra.mxu0 0
    %232 = vmatprep.subr.bf16.mxu0 0
    %233 = vmatpush1.bf16.msra.mxu0 0
    %234 = vmatprep.subr.bf16.mxu0 0
    %235 = vmatpush1.bf16.msra.mxu0 %v214
    %236 = vmatprep.subr.bf16.mxu0 0
    %237 = vmatpush2.bf16.msra.mxu0 0
    %238 = vmatprep.subr.bf16.mxu0 0
    %239 = vmatpush2.bf16.msra.mxu0 0
    %240 = vmatprep.subr.bf16.mxu0 0
    %241 = vmatpush2.bf16.msra.mxu0 0
    %242 = vmatprep.subr.bf16.mxu0 0
    %243 = vmatpush2.bf16.msra.mxu0 0
    %244 = vmatprep.subr.bf16.mxu0 0
    %245 = vmatpush2.bf16.msra.mxu0 0
    %246 = vmatprep.subr.bf16.mxu0 0
    %247 = vmatpush2.bf16.msra.mxu0 0
    %248 = vmatprep.subr.bf16.mxu0 0
    %249 = vmatpush2.bf16.msra.mxu0 0
    %250 = vmatprep.subr.bf16.mxu0 0
    %251 = vmatpush2.bf16.msra.mxu0 0
    %252 = vmatprep.mubr.bf16.mxu0 0
    %253 = vmatmul.mubr.bf16.gmra.mxu0 %v218
    %v254 = vpop.f32.mrf.mxu0
    %v255 = vadd.f32 %v208, %v254
    %v256 = vpop.f32.mrf.mxu0
    %v257 = vpop.f32.mrf.mxu0
    %v258 = vpop.f32.mrf.mxu0
    %259 = vdwg.mxu0
    %v260 = vxor.u32 %v255, 2147483648
    %v261 = vmul.f32 %v260, 1.442695
    %v262 = vpow.pop %v261
    %v263 = vadd.f32 %v262, 1.0
    %v264 = vrcp.pop %v263
    %v265 = vmul.f32 1.0, %v264
    %vm266 = vcmask 7168
    %267 = vst.msk [vmem:[%s3] sm:$0xff] %vm266, %v265
    // Predicated region
    $region22: #{tpu_custom_call.1} parent=1 // pred_check
      _
    $region23: #{tpu_custom_call.1} parent=1 // pred_check_branch
      %269 = sbr.rel (0) target = $region25
    $region24: #{tpu_custom_call.1} parent=1 // pred_region
      _
    $region25: #{tpu_custom_call.1} parent=1 // pred_fallthru
      _
    // Predicated region
    $region26: #{tpu_custom_call.1} parent=1 // pred_check
      _
    $region27: #{tpu_custom_call.1} parent=1 // pred_check_branch
      %271 = sbr.rel (0) target = $region29
    $region28: #{tpu_custom_call.1} parent=1 // pred_region
      _
    $region29: #{tpu_custom_call.1} parent=1 // pred_fallthru
      _
    %272 = vsyncpa [#allocation3], 1
    %273 = vsyncpa [#allocation5], 1

</llo_original>
